<compile_context>
chip_gen: v5e
topology: v5e:2x2
jax: 0.10.0
libtpu: 0.0.40
codegen_flags: <defaults>
</compile_context>

<pallas_src>
import jax
import jax.numpy as jnp
from jax.experimental import pallas as pl
from jax.experimental.pallas import tpu as pltpu

# ---- static configuration --------------------------------------------------
D_IN = 22
H = 16          # node0 / node1 output width
H2_PRE = 32     # node2 pre-interface hidden width
D_OUT = 8       # final output width
K0, K1, K2 = 2, 3, 2        # num_modules
N1 = 256                    # packed stage-1 hidden width (226 used, padded to lane multiple)
MAX_TB = 1024               # batch tile cap


def _round_up(x, m):
    return (x + m - 1) // m * m


# ---- Pallas kernel ----------------------------------------------------------
def _comp_mlp_kernel(x_ref, p_ref, w2_ref, o_ref):
    x = x_ref[...]                                                     # (TB, 22) f32

    # One packed matmul produces, in 128-aligned 256-wide column groups:
    #   [0   : 256] pre-activations (hidden biases already folded in via assignment rows)
    #               + two pass-through columns carrying the node-2 assignment bits
    #   [256 : 512] own-node one-hot module mask
    #   [512 : 768] node-2 module gate (oh2 broadcast over the duplicated y-column groups)
    xm = jnp.dot(x, p_ref[...], preferred_element_type=jnp.float32)    # (TB, 768)

    h = jnp.maximum(xm[:, 0:N1], 0.0)                                  # ReLU hidden
    hm = h * xm[:, N1:2 * N1] * xm[:, 2 * N1:3 * N1]                   # double gate

    # Packed post-interface matmul: y0/y1 concat is encoded as replicated rows, the
    # node-2 selection and output bias are encoded as gated rows -> direct (TB, 8) result.
    o_ref[...] = jnp.dot(hm, w2_ref[...], preferred_element_type=jnp.float32)


# ---- wrapper ----------------------------------------------------------------
def comp_mlp_forward(inp, packed):
    P, W2 = packed
    B = inp.shape[0]

    # Tile: big (fewer grid steps), but split in two when everything fits one tile so that
    # the 'parallel' batch axis can shard across both TensorCores on v7x.
    tb = min(MAX_TB, _round_up(max((B + 1) // 2, 8), 8))
    b_pad = _round_up(B, tb)
    if b_pad != B:
        inp = jnp.pad(inp, ((0, b_pad - B), (0, 0)))   # padded rows: zero assignment bits

    out = pl.pallas_call(
        _comp_mlp_kernel,
        out_shape=jax.ShapeDtypeStruct((b_pad, D_OUT), jnp.float32),
        grid=(b_pad // tb,),
        in_specs=[
            pl.BlockSpec((tb, D_IN), lambda i: (i, 0)),
            pl.BlockSpec(P.shape, lambda i: (0, 0)),
            pl.BlockSpec(W2.shape, lambda i: (0, 0)),
        ],
        out_specs=pl.BlockSpec((tb, D_OUT), lambda i: (i, 0)),
        compiler_params=pltpu.CompilerParams(
            dimension_semantics=("parallel",),
            vmem_limit_bytes=32 * 1024 * 1024,
        ),
    )(inp, P, W2)

    return out[:B]


# ---- weight packing (done once, outside the kernel) --------------------------
# Stage-1 column layout (width 256):
#   Y_A (y columns gated by node-2 module 0):  0:16 n0m0 | 16:32 n0m1 | 32:48 n1m0 | 48:64 n1m1 | 64:80 n1m2
#   Y_B (same, gated by node-2 module 1):      80:160 (same internal layout, +80 offset)
#   P0  (node-2 module-0 pre-interface):       160:192
#   P1  (node-2 module-1 pre-interface):       192:224
#   bias gates (oh2_0, oh2_1 pass-through):    224, 225
#   zero padding:                              226:256
def pack_params(params):
    w0, b0, w1, b1, w2p, b2p, w2q, b2q = params
    f32 = jnp.float32

    # ---- W1 block: pre-activations, with hidden biases folded into assignment rows.
    W1 = jnp.zeros((D_IN, N1), f32)
    for off in (0, 80):                                   # Y_A and Y_B copies
        W1 = W1.at[0:6, off + 0:off + 16].set(w0[0]).at[0:6, off + 16:off + 32].set(w0[1])
        W1 = (W1.at[6:11, off + 32:off + 48].set(w1[0])
                 .at[6:11, off + 48:off + 64].set(w1[1])
                 .at[6:11, off + 64:off + 80].set(w1[2]))
        # bias of module k fires off its own assignment bit (exact for one-hot inputs)
        W1 = W1.at[15, off + 0:off + 16].set(b0[0, 0]).at[16, off + 16:off + 32].set(b0[1, 0])
        W1 = (W1.at[17, off + 32:off + 48].set(b1[0, 0])
                 .at[18, off + 48:off + 64].set(b1[1, 0])
                 .at[19, off + 64:off + 80].set(b1[2, 0]))
    W1 = W1.at[11:15, 160:192].set(w2p[0]).at[11:15, 192:224].set(w2p[1])
    W1 = W1.at[20, 160:192].set(b2p[0, 0]).at[21, 192:224].set(b2p[1, 0])
    W1 = W1.at[20, 224].set(1.0).at[21, 225].set(1.0)      # oh2 pass-through (for output bias)

    # ---- S1 block: own-node one-hot module mask.
    S1 = jnp.zeros((D_IN, N1), f32)
    for off in (0, 80):
        S1 = S1.at[15, off + 0:off + 16].set(1.0).at[16, off + 16:off + 32].set(1.0)
        S1 = (S1.at[17, off + 32:off + 48].set(1.0)
                 .at[18, off + 48:off + 64].set(1.0)
                 .at[19, off + 64:off + 80].set(1.0))
    S1 = S1.at[20, 160:192].set(1.0).at[21, 192:224].set(1.0)
    S1 = S1.at[20, 224].set(1.0).at[21, 225].set(1.0)

    # ---- G block: node-2 module gate (oh2 broadcast).
    G = jnp.zeros((D_IN, N1), f32)
    G = G.at[20, 0:80].set(1.0)        # Y_A gated by oh2[0]
    G = G.at[21, 80:160].set(1.0)      # Y_B gated by oh2[1]
    G = G.at[20, 160:192].set(1.0)     # P0 (gate^2 == gate for one-hot)
    G = G.at[21, 192:224].set(1.0)     # P1
    G = G.at[20, 224].set(1.0).at[21, 225].set(1.0)

    P = jnp.concatenate([W1, S1, G], axis=1)               # (22, 768)

    # ---- Stage-2 packed weight (256, 8): replicated rows implement the y0/y1 sum+concat,
    #      gated hidden/pass-through rows implement module selection and the output bias.
    W2 = jnp.zeros((N1, D_OUT), f32)
    # Y_A -> w2q[0] (node-2 module 0)
    W2 = W2.at[0:16].set(w2q[0][0:16]).at[16:32].set(w2q[0][0:16])
    W2 = (W2.at[32:48].set(w2q[0][16:32])
             .at[48:64].set(w2q[0][16:32])
             .at[64:80].set(w2q[0][16:32]))
    # Y_B -> w2q[1] (node-2 module 1)
    W2 = W2.at[80:96].set(w2q[1][0:16]).at[96:112].set(w2q[1][0:16])
    W2 = (W2.at[112:128].set(w2q[1][16:32])
             .at[128:144].set(w2q[1][16:32])
             .at[144:160].set(w2q[1][16:32]))
    # pre-interface rows
    W2 = W2.at[160:192].set(w2q[0][32:64]).at[192:224].set(w2q[1][32:64])
    # gated output biases
    W2 = W2.at[224].set(b2q[0, 0]).at[225].set(b2q[1, 0])

    return P, W2


# ---- deterministic parameter init (mirrors fanin_init / b_init / init_w) ----
def init_params(key):
    ks = jax.random.split(key, 5)

    def hidden(k, kmods, din, dout):
        bound = 1.0 / (din ** 0.5)
        w = jax.random.uniform(k, (kmods, din, dout), jnp.float32, -bound, bound)
        b = jnp.full((kmods, 1, dout), 0.1, jnp.float32)     # b_init_value = 0.1
        return w, b

    def output(kw, kb, kmods, din, dout, init_w=0.003):
        w = jax.random.uniform(kw, (kmods, din, dout), jnp.float32, -init_w, init_w)
        b = jax.random.uniform(kb, (kmods, 1, dout), jnp.float32, -init_w, init_w)
        return w, b

    w0, b0 = hidden(ks[0], K0, 6, H)
    w1, b1 = hidden(ks[1], K1, 5, H)
    w2p, b2p = hidden(ks[2], K2, 4, H2_PRE)
    w2q, b2q = output(ks[3], ks[4], K2, 2 * H + H2_PRE, D_OUT)
    return (w0, b0, w1, b1, w2p, b2p, w2q, b2q)


# ---- pure-JAX reference (same math, outside Pallas) for validation ----------
def reference(inp, params):
    w0, b0, w1, b1, w2p, b2p, w2q, b2q = params
    feat0, feat1, feat2 = inp[:, 0:6], inp[:, 6:11], inp[:, 11:15]
    oh0, oh1, oh2 = inp[:, 15:17], inp[:, 17:20], inp[:, 20:22]
    y0 = sum(oh0[:, k:k + 1] * jax.nn.relu(feat0 @ w0[k] + b0[k]) for k in range(K0))
    y1 = sum(oh1[:, k:k + 1] * jax.nn.relu(feat1 @ w1[k] + b1[k]) for k in range(K1))
    xp = jnp.concatenate([y0, y1], axis=-1)
    out = jnp.zeros((inp.shape[0], D_OUT), jnp.float32)
    for k in range(K2):
        pre = jax.nn.relu(feat2 @ w2p[k] + b2p[k])
        out = out + oh2[:, k:k + 1] * (jnp.concatenate([xp, pre], -1) @ w2q[k] + b2q[k])
    return out


def _make_inputs(key, B):
    kf, km0, km1, km2 = jax.random.split(key, 4)
    feats = jax.random.normal(kf, (B, 15), jnp.float32)
    oh0 = jax.nn.one_hot(jax.random.randint(km0, (B,), 0, K0), K0, dtype=jnp.float32)
    oh1 = jax.nn.one_hot(jax.random.randint(km1, (B,), 0, K1), K1, dtype=jnp.float32)
    oh2 = jax.nn.one_hot(jax.random.randint(km2, (B,), 0, K2), K2, dtype=jnp.float32)
    return jnp.concatenate([feats, oh0, oh1, oh2], axis=-1)   # (B, 22)


if __name__ == "__main__":
    key = jax.random.PRNGKey(0)
    kin, kin2, kp = jax.random.split(key, 3)

    params = init_params(kp)
    packed = pack_params(params)

    # Primary small check (B=16 -> two grid steps of 8 rows each).
    B = 16
    input_val = _make_inputs(kin, B)
    out = jax.block_until_ready(comp_mlp_forward(input_val, packed))
    ref = reference(input_val, params)
    assert out.shape == (B, D_OUT)
    assert jnp.allclose(out, ref, atol=5e-4, rtol=5e-4), "Pallas kernel mismatch vs reference"

    # Secondary check exercising the batch-padding path (B not a multiple of the tile).
    B2 = 50
    input_val2 = _make_inputs(kin2, B2)
    out2 = jax.block_until_ready(comp_mlp_forward(input_val2, packed))
    ref2 = reference(input_val2, params)
    assert out2.shape == (B2, D_OUT)
    assert jnp.allclose(out2, ref2, atol=5e-4, rtol=5e-4), "Pallas kernel mismatch (padded batch)"

    print("KERNEL_OK")
</pallas_src>

<mosaic_0001>
module attributes {stable_mosaic.version = 11 : i64} {
  func.func @_comp_mlp_kernel(%arg0: i32, %arg1: memref<8x22xf32, #tpu.memory_space<vmem>>, %arg2: memref<22x768xf32, #tpu.memory_space<vmem>>, %arg3: memref<256x8xf32, #tpu.memory_space<vmem>>, %arg4: memref<8x8xf32, #tpu.memory_space<vmem>>) attributes {dimension_semantics = [#tpu.dimension_semantics<parallel>], iteration_bounds = array<i64: 2>, scalar_prefetch = 0 : i64, scratch_operands = 0 : i64, tpu.core_type = #tpu.core_type<tc>, window_params = [{transform_indices = @transform_0, window_bounds = array<i64: 8, 22>}, {pipeline_mode = #tpu.pipeline_mode<synchronous>, transform_indices = @transform_1, window_bounds = array<i64: 22, 768>}, {pipeline_mode = #tpu.pipeline_mode<synchronous>, transform_indices = @transform_2, window_bounds = array<i64: 256, 8>}, {transform_indices = @transform_3, window_bounds = array<i64: 8, 8>}]} {
    %c0 = arith.constant 0 : index
    %c0_0 = arith.constant 0 : index
    %0 = vector.load %arg1[%c0, %c0_0] : memref<8x22xf32, #tpu.memory_space<vmem>>, vector<8x22xf32>
    %c0_1 = arith.constant 0 : index
    %c0_2 = arith.constant 0 : index
    %1 = vector.load %arg2[%c0_1, %c0_2] : memref<22x768xf32, #tpu.memory_space<vmem>>, vector<22x768xf32>
    %cst = arith.constant dense<0.000000e+00> : vector<8x768xf32>
    %2 = tpu.matmul %0, %1, %cst {dimension_numbers = #tpu.dot_dimension_numbers<[1], [0], [0], [1], [0, 0, 1, 1], [], []>} : vector<8x22xf32>, vector<22x768xf32>, vector<8x768xf32> -> vector<8x768xf32>
    %3 = vector.extract_strided_slice %2 {offsets = [0, 0], sizes = [8, 256], strides = [1, 1]} : vector<8x768xf32> to vector<8x256xf32>
    %cst_3 = arith.constant 0.000000e+00 : f32
    %4 = vector.broadcast %cst_3 : f32 to vector<8x256xf32>
    %5 = arith.maximumf %3, %4 : vector<8x256xf32>
    %6 = vector.extract_strided_slice %2 {offsets = [0, 256], sizes = [8, 256], strides = [1, 1]} : vector<8x768xf32> to vector<8x256xf32>
    %7 = arith.mulf %5, %6 : vector<8x256xf32>
    %8 = vector.extract_strided_slice %2 {offsets = [0, 512], sizes = [8, 256], strides = [1, 1]} : vector<8x768xf32> to vector<8x256xf32>
    %9 = arith.mulf %7, %8 : vector<8x256xf32>
    %c0_4 = arith.constant 0 : index
    %c0_5 = arith.constant 0 : index
    %10 = vector.load %arg3[%c0_4, %c0_5] : memref<256x8xf32, #tpu.memory_space<vmem>>, vector<256x8xf32>
    %cst_6 = arith.constant dense<0.000000e+00> : vector<8x8xf32>
    %11 = tpu.matmul %9, %10, %cst_6 {dimension_numbers = #tpu.dot_dimension_numbers<[1], [0], [0], [1], [0, 0, 1, 1], [], []>} : vector<8x256xf32>, vector<256x8xf32>, vector<8x8xf32> -> vector<8x8xf32>
    %c0_7 = arith.constant 0 : index
    %c0_8 = arith.constant 0 : index
    %12 = vector.load %arg4[%c0_7, %c0_8] : memref<8x8xf32, #tpu.memory_space<vmem>>, vector<8x8xf32>
    tpu.vector_store %arg4[%c0_7, %c0_8], %11 {strides = array<i32>} : memref<8x8xf32, #tpu.memory_space<vmem>>, vector<8x8xf32>,
    return
  }
  func.func @transform_0(%arg0: i32) -> (i32, i32) {
    %c0_i32 = arith.constant 0 : i32
    %c0_i32_0 = arith.constant 0 : i32
    return %arg0, %c0_i32 : i32, i32
  }
  func.func @transform_1(%arg0: i32) -> (i32, i32) {
    %c0_i32 = arith.constant 0 : i32
    %c0_i32_0 = arith.constant 0 : i32
    %c0_i32_1 = arith.constant 0 : i32
    return %c0_i32, %c0_i32_0 : i32, i32
  }
  func.func @transform_2(%arg0: i32) -> (i32, i32) {
    %c0_i32 = arith.constant 0 : i32
    %c0_i32_0 = arith.constant 0 : i32
    %c0_i32_1 = arith.constant 0 : i32
    return %c0_i32, %c0_i32_0 : i32, i32
  }
  func.func @transform_3(%arg0: i32) -> (i32, i32) {
    %c0_i32 = arith.constant 0 : i32
    %c0_i32_0 = arith.constant 0 : i32
    return %arg0, %c0_i32 : i32, i32
  }
}

</mosaic_0001>

<llo_original>
// kernel: tpu_custom_call.1
$region0: #{tpu_custom_call.1}
  #allocation0 [shape = 'u32[]', space=smem, size = 0x4, offset = 0x4, fixed_abs, tag = 'smem constant byte address 0x4 - core index']
  #allocation1 [shape = 'u32[72,128]{1,0:T(1,128)}', space=vmem, size = 0x9000, scoped, tag = 'internal scratch']
  %s0 = inlined_call_operand.vmem [shape: f32[16,22], index: 0, kind: input, shape index: {}]
  %s1 = inlined_call_operand.vmem [shape: f32[22,768], index: 1, kind: input, shape index: {}]
  %s2 = inlined_call_operand.vmem [shape: f32[256,8], index: 2, kind: input, shape index: {}]
  %s3 = inlined_call_operand.vmem [shape: f32[16,8], index: 3, kind: output, shape index: {}]
  %s4 = sld [smem:[#allocation0]]
  $region45: #{tpu_custom_call.1} parent=0
    _
  %s6 = ssub.s32 1, %s4
  %s7 = scalar_select 0, %s6, %s4
  loop: start=0, step=1, limit=4
  $region2: #{tpu_custom_call.1} parent=0 // loop_pre_header
    _
  $region3: #{tpu_custom_call.1} parent=0 // loop_header
    %s9 = sphi 0, %s13
    %p10 = scmp.ge.s32.totalorder %s9, 4
    %s19 = sphi 0, %s21
    %s22 = sphi 0, %s19
    %s23 = sphi 0, %s22
    %s39 = sphi 0, %s23
    %s43 = sphi 0, %s43
    %s45 = sphi 0, %s43
    %s46 = sphi 0, %s45
    %s60 = sphi 0, %s46
    %s64 = sphi 0, %s64
    %s66 = sphi 0, %s64
    %s67 = sphi 0, %s66
    %s81 = sphi 0, %s67
    %s87 = sphi 0, %s89
    %s90 = sphi 0, %s87
    %s91 = sphi 0, %s90
    %s107 = sphi 0, %s91
  $region4: #{tpu_custom_call.1} parent=0 // loop_header_branch
    %12 = sbr.rel (%p10) target = $region8
  $region5: #{tpu_custom_call.1} parent=0 // loop_body
    %s14 = ssub.s32 %s9, 1
    %s15 = ssub.s32 %s9, 2
    %s16 = sadd.s32 %s9, 1
    %s17 = ssub.s32 %s9, %s16
    %p18 = scmp.eq.s32.totalorder %s17, 0
    %s20 = sadd.s32 %s19, 1
    %s21 = scalar_select %p18, %s19, %s20
    %p24 = pneg %p18
    %p25 = scmp.eq.s32.totalorder %s9, 1
    %p26 = por %p24, %p25
    %p27 = scmp.ne.s32.totalorder %s19, %s22
    %p28 = scmp.eq.s32.totalorder %s9, 0
    %p29 = por %p27, %p28
    %p30 = scmp.ne.s32.totalorder %s19, %s22
    %p31 = scmp.eq.s32.totalorder %s14, 1
    %p32 = por %p30, %p31
    %p33 = scmp.ne.s32.totalorder %s22, %s23
    %p34 = scmp.eq.s32.totalorder %s14, 0
    %p35 = por %p33, %p34
    %p36 = scmp.ne.s32.totalorder %s22, %s23
    %p37 = scmp.eq.s32.totalorder %s15, 1
    %p38 = por %p36, %p37
    %p40 = scmp.ne.s32.totalorder %s23, %s39
    %p41 = scmp.eq.s32.totalorder %s15, 0
    %p42 = por %p40, %p41
    %s44 = sadd.s32 %s43, 1
    %p47 = scmp.eq.s32.totalorder %s9, 1
    %p48 = scmp.ne.s32.totalorder %s43, %s45
    %p49 = scmp.eq.s32.totalorder %s9, 0
    %p50 = por %p48, %p49
    %p51 = scmp.ne.s32.totalorder %s43, %s45
    %p52 = scmp.eq.s32.totalorder %s14, 1
    %p53 = por %p51, %p52
    %p54 = scmp.ne.s32.totalorder %s45, %s46
    %p55 = scmp.eq.s32.totalorder %s14, 0
    %p56 = por %p54, %p55
    %p57 = scmp.ne.s32.totalorder %s45, %s46
    %p58 = scmp.eq.s32.totalorder %s15, 1
    %p59 = por %p57, %p58
    %p61 = scmp.ne.s32.totalorder %s46, %s60
    %p62 = scmp.eq.s32.totalorder %s15, 0
    %p63 = por %p61, %p62
    %s65 = sadd.s32 %s64, 1
    %p68 = scmp.eq.s32.totalorder %s9, 1
    %p69 = scmp.ne.s32.totalorder %s64, %s66
    %p70 = scmp.eq.s32.totalorder %s9, 0
    %p71 = por %p69, %p70
    %p72 = scmp.ne.s32.totalorder %s64, %s66
    %p73 = scmp.eq.s32.totalorder %s14, 1
    %p74 = por %p72, %p73
    %p75 = scmp.ne.s32.totalorder %s66, %s67
    %p76 = scmp.eq.s32.totalorder %s14, 0
    %p77 = por %p75, %p76
    %p78 = scmp.ne.s32.totalorder %s66, %s67
    %p79 = scmp.eq.s32.totalorder %s15, 1
    %p80 = por %p78, %p79
    %p82 = scmp.ne.s32.totalorder %s67, %s81
    %p83 = scmp.eq.s32.totalorder %s15, 0
    %p84 = por %p82, %p83
    %s85 = ssub.s32 %s9, %s16
    %p86 = scmp.eq.s32.totalorder %s85, 0
    %s88 = sadd.s32 %s87, 1
    %s89 = scalar_select %p86, %s87, %s88
    %p92 = pneg %p86
    %p93 = scmp.eq.s32.totalorder %s9, 1
    %p94 = por %p92, %p93
    %p95 = scmp.ne.s32.totalorder %s87, %s90
    %p96 = scmp.eq.s32.totalorder %s9, 0
    %p97 = por %p95, %p96
    %p98 = scmp.ne.s32.totalorder %s87, %s90
    %p99 = scmp.eq.s32.totalorder %s14, 1
    %p100 = por %p98, %p99
    %p101 = scmp.ne.s32.totalorder %s90, %s91
    %p102 = scmp.eq.s32.totalorder %s14, 0
    %p103 = por %p101, %p102
    %p104 = scmp.ne.s32.totalorder %s90, %s91
    %p105 = scmp.eq.s32.totalorder %s15, 1
    %p106 = por %p104, %p105
    %p108 = scmp.ne.s32.totalorder %s91, %s107
    %p109 = scmp.eq.s32.totalorder %s15, 0
    %p110 = por %p108, %p109
    %p111 = scmp.le.s32.totalorder 1, %s9
    %p112 = scmp.lt.s32.totalorder %s9, 3
    %p113 = pnand %p111, %p112
    %p114 = pneg %p113
    // Predicated region
    $region9: #{tpu_custom_call.1} parent=5 // pred_check
      _
    $region10: #{tpu_custom_call.1} parent=5 // pred_check_branch
      %116 = sbr.rel (%p113) target = $region12
    $region11: #{tpu_custom_call.1} parent=5 // pred_region
      %s117 = ssub.s32 %s9, 1
      // Predicated region
      $region13: #{tpu_custom_call.1} parent=11 // pred_check
        %p118 = pneg %p56
      $region14: #{tpu_custom_call.1} parent=11 // pred_check_branch
        %120 = sbr.rel (%p118) target = $region16
      $region15: #{tpu_custom_call.1} parent=11 // pred_region
        _
      $region16: #{tpu_custom_call.1} parent=11 // pred_fallthru
        _
      // Predicated region
      $region17: #{tpu_custom_call.1} parent=11 // pred_check
        %p121 = pneg %p77
      $region18: #{tpu_custom_call.1} parent=11 // pred_check_branch
        %123 = sbr.rel (%p121) target = $region20
      $region19: #{tpu_custom_call.1} parent=11 // pred_region
        _
      $region20: #{tpu_custom_call.1} parent=11 // pred_fallthru
        _
    $region12: #{tpu_custom_call.1} parent=5 // pred_fallthru
      _
    %p124 = scmp.lt.s32.totalorder %s9, 2
    // Predicated region
    $region21: #{tpu_custom_call.1} parent=5 // pred_check
      %p125 = pneg %p124
    $region22: #{tpu_custom_call.1} parent=5 // pred_check_branch
      %127 = sbr.rel (%p125) target = $region24
    $region23: #{tpu_custom_call.1} parent=5 // pred_region
      // Predicated region
      $region25: #{tpu_custom_call.1} parent=23 // pred_check
        %p128 = pneg %p29
      $region26: #{tpu_custom_call.1} parent=23 // pred_check_branch
        %130 = sbr.rel (%p128) target = $region28
      $region27: #{tpu_custom_call.1} parent=23 // pred_region
        %p131 = scmp.lt.s32.totalorder %s9, 1
        %s132 = scalar_select %p131, %s9, 1
        %s133 = smul.addr %s132, 8
        %s134 = scalar_lea.vmem %s0, %s133
      $region28: #{tpu_custom_call.1} parent=23 // pred_fallthru
        _
    $region24: #{tpu_custom_call.1} parent=5 // pred_fallthru
      _
    %p135 = scmp.le.s32.totalorder 1, %s9
    %p136 = scmp.lt.s32.totalorder %s9, 3
    %p137 = pnand %p135, %p136
    %p138 = pneg %p137
    // Predicated region
    $region29: #{tpu_custom_call.1} parent=5 // pred_check
      _
    $region30: #{tpu_custom_call.1} parent=5 // pred_check_branch
      %140 = sbr.rel (%p137) target = $region32
    $region31: #{tpu_custom_call.1} parent=5 // pred_region
      %s141 = ssub.s32 %s9, 1
      %p142 = scmp.lt.s32.totalorder %s14, 1
      %s143 = scalar_select %p142, %s14, 1
      %s144 = smul.addr %s143, 8
      %s145 = scalar_lea.vmem %s0, %s144
      %p146 = pneg %p35
      %p147 = pneg %p32
      %p148 = pneg %p56
      %p149 = pneg %p53
      %p150 = pneg %p77
      %p151 = pneg %p74
      %p152 = pneg %p103
      %p153 = pneg %p100
      %p154 = scmp.lt.s32.totalorder %s14, 1
      %s155 = scalar_select %p154, %s14, 1
      %s156 = smul.addr %s155, 8
      %s157 = scalar_lea.vmem %s3, %s156
      %p158 = scmp.lt.s32.totalorder %s14, 1
      %s159 = scalar_select %p158, %s14, 1
      %s160 = smul.addr %s159, 8
      %s161 = scalar_lea.vmem %s0, %s160
      %p162 = scmp.lt.s32.totalorder %s14, 1
      %s163 = scalar_select %p162, %s14, 1
      %s164 = smul.addr %s163, 8
      %s165 = scalar_lea.vmem %s3, %s164
      %v166 = vld [vmem:[%s161] sm:$0xff]
      %v167 = vld [vmem:[%s1] sm:$0xff]
      %v168 = vld [vmem:[%s1 + $0x8] sm:$0xff]
      %v169 = vld [vmem:[%s1 + $0x10] sm:$0xff]
      %v170 = vld [vmem:[%s1 + $0x18] sm:$0xff]
      %v171 = vld [vmem:[%s1 + $0x20] sm:$0xff]
      %v172 = vld [vmem:[%s1 + $0x28] sm:$0xff]
      %v173 = vld [vmem:[%s1 + $0x30] sm:$0xff]
      %v174 = vld [vmem:[%s1 + $0x38] sm:$0xff]
      %v175 = vld [vmem:[%s1 + $0x40] sm:$0xff]
      %v176 = vld [vmem:[%s1 + $0x48] sm:$0xff]
      %v177 = vld [vmem:[%s1 + $0x50] sm:$0xff]
      %v178 = vld [vmem:[%s1 + $0x58] sm:$0xff]
      %v179 = vld [vmem:[%s1 + $0x60] sm:$0x3f]
      %v180 = vld [vmem:[%s1 + $0x68] sm:$0x3f]
      %v181 = vld [vmem:[%s1 + $0x70] sm:$0x3f]
      %v182 = vld [vmem:[%s1 + $0x78] sm:$0x3f]
      %v183 = vld [vmem:[%s1 + $0x80] sm:$0x3f]
      %v184 = vld [vmem:[%s1 + $0x88] sm:$0x3f]
      %vm185 = vcmask 179200
      %v187 = vsel %vm185, %v166, 0
      %vm189 = vcmask 1045504
      %v191 = vsel %vm189, %v179, 0
      %v194 = vsel %vm189, %v180, 0
      %v197 = vsel %vm189, %v181, 0
      %v200 = vsel %vm189, %v182, 0
      %v203 = vsel %vm189, %v183, 0
      %v206 = vsel %vm189, %v184, 0
      %208 = vmatpush.msra.mxu0 0.0
      %209 = vmatpush.msra.mxu0 0.0
      %210 = vmatpush.msra.mxu0 0.0
      %211 = vmatpush.msra.mxu0 0.0
      %212 = vmatpush.msra.mxu0 0.0
      %213 = vmatpush.msra.mxu0 0.0
      %214 = vmatpush.msra.mxu0 0.0
      %215 = vmatpush.msra.mxu0 0.0
      %216 = vmatpush.msra.mxu0 0.0
      %217 = vmatpush.msra.mxu0 0.0
      %218 = vmatpush.msra.mxu0 0.0
      %219 = vmatpush.msra.mxu0 0.0
      %220 = vmatpush.msra.mxu0 0.0
      %221 = vmatpush.msra.mxu0 %v191
      %222 = vmatpush.msra.mxu0 %v173
      %223 = vmatpush.msra.mxu0 %v167
      %224 = vmatmul.f32.gmra.mxu0 %v187
      %v225 = vpop.f32.mrf.mxu0
      %v226 = vadd.f32 0.0, %v225
      %227 = vdwg.mxu0
      %228 = vmatpush.msra.mxu0 0.0
      %229 = vmatpush.msra.mxu0 0.0
      %230 = vmatpush.msra.mxu0 0.0
      %231 = vmatpush.msra.mxu0 0.0
      %232 = vmatpush.msra.mxu0 0.0
      %233 = vmatpush.msra.mxu0 0.0
      %234 = vmatpush.msra.mxu0 0.0
      %235 = vmatpush.msra.mxu0 0.0
      %236 = vmatpush.msra.mxu0 0.0
      %237 = vmatpush.msra.mxu0 0.0
      %238 = vmatpush.msra.mxu0 0.0
      %239 = vmatpush.msra.mxu0 0.0
      %240 = vmatpush.msra.mxu0 0.0
      %241 = vmatpush.msra.mxu0 %v194
      %242 = vmatpush.msra.mxu0 %v174
      %243 = vmatpush.msra.mxu0 %v168
      %244 = vmatmul.f32.gmra.mxu0 %v187
      %v245 = vpop.f32.mrf.mxu0
      %v246 = vadd.f32 0.0, %v245
      %247 = vdwg.mxu0
      %248 = vmatpush.msra.mxu0 0.0
      %249 = vmatpush.msra.mxu0 0.0
      %250 = vmatpush.msra.mxu0 0.0
      %251 = vmatpush.msra.mxu0 0.0
      %252 = vmatpush.msra.mxu0 0.0
      %253 = vmatpush.msra.mxu0 0.0
      %254 = vmatpush.msra.mxu0 0.0
      %255 = vmatpush.msra.mxu0 0.0
      %256 = vmatpush.msra.mxu0 0.0
      %257 = vmatpush.msra.mxu0 0.0
      %258 = vmatpush.msra.mxu0 0.0
      %259 = vmatpush.msra.mxu0 0.0
      %260 = vmatpush.msra.mxu0 0.0
      %261 = vmatpush.msra.mxu0 %v197
      %262 = vmatpush.msra.mxu0 %v175
      %263 = vmatpush.msra.mxu0 %v169
      %264 = vmatmul.f32.gmra.mxu0 %v187
      %v265 = vpop.f32.mrf.mxu0
      %v266 = vadd.f32 0.0, %v265
      %267 = vdwg.mxu0
      %268 = vmatpush.msra.mxu0 0.0
      %269 = vmatpush.msra.mxu0 0.0
      %270 = vmatpush.msra.mxu0 0.0
      %271 = vmatpush.msra.mxu0 0.0
      %272 = vmatpush.msra.mxu0 0.0
      %273 = vmatpush.msra.mxu0 0.0
      %274 = vmatpush.msra.mxu0 0.0
      %275 = vmatpush.msra.mxu0 0.0
      %276 = vmatpush.msra.mxu0 0.0
      %277 = vmatpush.msra.mxu0 0.0
      %278 = vmatpush.msra.mxu0 0.0
      %279 = vmatpush.msra.mxu0 0.0
      %280 = vmatpush.msra.mxu0 0.0
      %281 = vmatpush.msra.mxu0 %v200
      %282 = vmatpush.msra.mxu0 %v176
      %283 = vmatpush.msra.mxu0 %v170
      %284 = vmatmul.f32.gmra.mxu0 %v187
      %v285 = vpop.f32.mrf.mxu0
      %v286 = vadd.f32 0.0, %v285
      %287 = vdwg.mxu0
      %288 = vmatpush.msra.mxu0 0.0
      %289 = vmatpush.msra.mxu0 0.0
      %290 = vmatpush.msra.mxu0 0.0
      %291 = vmatpush.msra.mxu0 0.0
      %292 = vmatpush.msra.mxu0 0.0
      %293 = vmatpush.msra.mxu0 0.0
      %294 = vmatpush.msra.mxu0 0.0
      %295 = vmatpush.msra.mxu0 0.0
      %296 = vmatpush.msra.mxu0 0.0
      %297 = vmatpush.msra.mxu0 0.0
      %298 = vmatpush.msra.mxu0 0.0
      %299 = vmatpush.msra.mxu0 0.0
      %300 = vmatpush.msra.mxu0 0.0
      %301 = vmatpush.msra.mxu0 %v203
      %302 = vmatpush.msra.mxu0 %v177
      %303 = vmatpush.msra.mxu0 %v171
      %304 = vmatmul.f32.gmra.mxu0 %v187
      %v305 = vpop.f32.mrf.mxu0
      %v306 = vadd.f32 0.0, %v305
      %307 = vdwg.mxu0
      %308 = vmatpush.msra.mxu0 0.0
      %309 = vmatpush.msra.mxu0 0.0
      %310 = vmatpush.msra.mxu0 0.0
      %311 = vmatpush.msra.mxu0 0.0
      %312 = vmatpush.msra.mxu0 0.0
      %313 = vmatpush.msra.mxu0 0.0
      %314 = vmatpush.msra.mxu0 0.0
      %315 = vmatpush.msra.mxu0 0.0
      %316 = vmatpush.msra.mxu0 0.0
      %317 = vmatpush.msra.mxu0 0.0
      %318 = vmatpush.msra.mxu0 0.0
      %319 = vmatpush.msra.mxu0 0.0
      %320 = vmatpush.msra.mxu0 0.0
      %321 = vmatpush.msra.mxu0 %v206
      %322 = vmatpush.msra.mxu0 %v178
      %323 = vmatpush.msra.mxu0 %v172
      %324 = vmatmul.f32.gmra.mxu0 %v187
      %v325 = vpop.f32.mrf.mxu0
      %v326 = vadd.f32 0.0, %v325
      %327 = vdwg.mxu0
      %v328 = vmax.f32 %v226, 0.0
      %v329 = vmax.f32 %v246, 0.0
      %v330 = vmul.f32 %v328, %v266
      %v331 = vmul.f32 %v329, %v286
      %v332 = vmul.f32 %v330, %v306
      %v333 = vmul.f32 %v331, %v326
      %v334 = vld [vmem:[%s2] sm:$0xff]
      %v335 = vld [vmem:[%s2 + $0x8] sm:$0xff]
      %v336 = vld [vmem:[%s2 + $0x10] sm:$0xff]
      %v337 = vld [vmem:[%s2 + $0x18] sm:$0xff]
      %v338 = vld [vmem:[%s2 + $0x20] sm:$0xff]
      %v339 = vld [vmem:[%s2 + $0x28] sm:$0xff]
      %v340 = vld [vmem:[%s2 + $0x30] sm:$0xff]
      %v341 = vld [vmem:[%s2 + $0x38] sm:$0xff]
      %v342 = vld [vmem:[%s2 + $0x40] sm:$0xff]
      %v343 = vld [vmem:[%s2 + $0x48] sm:$0xff]
      %v344 = vld [vmem:[%s2 + $0x50] sm:$0xff]
      %v345 = vld [vmem:[%s2 + $0x58] sm:$0xff]
      %v346 = vld [vmem:[%s2 + $0x60] sm:$0xff]
      %v347 = vld [vmem:[%s2 + $0x68] sm:$0xff]
      %v348 = vld [vmem:[%s2 + $0x70] sm:$0xff]
      %v349 = vld [vmem:[%s2 + $0x78] sm:$0xff]
      %v350 = vld [vmem:[%s2 + $0x80] sm:$0xff]
      %v351 = vld [vmem:[%s2 + $0x88] sm:$0xff]
      %v352 = vld [vmem:[%s2 + $0x90] sm:$0xff]
      %v353 = vld [vmem:[%s2 + $0x98] sm:$0xff]
      %v354 = vld [vmem:[%s2 + $0xa0] sm:$0xff]
      %v355 = vld [vmem:[%s2 + $0xa8] sm:$0xff]
      %v356 = vld [vmem:[%s2 + $0xb0] sm:$0xff]
      %v357 = vld [vmem:[%s2 + $0xb8] sm:$0xff]
      %v358 = vld [vmem:[%s2 + $0xc0] sm:$0xff]
      %v359 = vld [vmem:[%s2 + $0xc8] sm:$0xff]
      %v360 = vld [vmem:[%s2 + $0xd0] sm:$0xff]
      %v361 = vld [vmem:[%s2 + $0xd8] sm:$0xff]
      %v362 = vld [vmem:[%s2 + $0xe0] sm:$0xff]
      %v363 = vld [vmem:[%s2 + $0xe8] sm:$0xff]
      %v364 = vld [vmem:[%s2 + $0xf0] sm:$0xff]
      %v365 = vld [vmem:[%s2 + $0xf8] sm:$0xff]
      %366 = vmatpush.msra.mxu0 %v349
      %367 = vmatpush.msra.mxu0 %v348
      %368 = vmatpush.msra.mxu0 %v347
      %369 = vmatpush.msra.mxu0 %v346
      %370 = vmatpush.msra.mxu0 %v345
      %371 = vmatpush.msra.mxu0 %v344
      %372 = vmatpush.msra.mxu0 %v343
      %373 = vmatpush.msra.mxu0 %v342
      %374 = vmatpush.msra.mxu0 %v341
      %375 = vmatpush.msra.mxu0 %v340
      %376 = vmatpush.msra.mxu0 %v339
      %377 = vmatpush.msra.mxu0 %v338
      %378 = vmatpush.msra.mxu0 %v337
      %379 = vmatpush.msra.mxu0 %v336
      %380 = vmatpush.msra.mxu0 %v335
      %381 = vmatpush.msra.mxu0 %v334
      %382 = vmatmul.f32.gmra.mxu0 %v332
      %v383 = vpop.f32.mrf.mxu0
      %v384 = vadd.f32 0.0, %v383
      %385 = vdwg.mxu0
      %386 = vmatpush.msra.mxu0 %v365
      %387 = vmatpush.msra.mxu0 %v364
      %388 = vmatpush.msra.mxu0 %v363
      %389 = vmatpush.msra.mxu0 %v362
      %390 = vmatpush.msra.mxu0 %v361
      %391 = vmatpush.msra.mxu0 %v360
      %392 = vmatpush.msra.mxu0 %v359
      %393 = vmatpush.msra.mxu0 %v358
      %394 = vmatpush.msra.mxu0 %v357
      %395 = vmatpush.msra.mxu0 %v356
      %396 = vmatpush.msra.mxu0 %v355
      %397 = vmatpush.msra.mxu0 %v354
      %398 = vmatpush.msra.mxu0 %v353
      %399 = vmatpush.msra.mxu0 %v352
      %400 = vmatpush.msra.mxu0 %v351
      %401 = vmatpush.msra.mxu0 %v350
      %402 = vmatmul.f32.gmra.mxu0 %v333
      %v403 = vpop.f32.mrf.mxu0
      %v404 = vadd.f32 %v384, %v403
      %405 = vdwg.mxu0
      %vm406 = vcmask 64512
      %407 = vst.msk [vmem:[%s165] sm:$0xff] %vm406, %v404
      %p408 = scmp.lt.s32.totalorder %s14, 1
      %s409 = scalar_select %p408, %s14, 1
      %s410 = smul.addr %s409, 8
      %s411 = scalar_lea.vmem %s3, %s410
      // Predicated region
      $region33: #{tpu_custom_call.1} parent=31 // pred_check
        %p412 = pneg %p100
      $region34: #{tpu_custom_call.1} parent=31 // pred_check_branch
        %414 = sbr.rel (%p412) target = $region36
      $region35: #{tpu_custom_call.1} parent=31 // pred_region
        _
      $region36: #{tpu_custom_call.1} parent=31 // pred_fallthru
        _
    $region32: #{tpu_custom_call.1} parent=5 // pred_fallthru
      _
    %p415 = scmp.le.s32.totalorder 2, %s9
    // Predicated region
    $region37: #{tpu_custom_call.1} parent=5 // pred_check
      %p416 = pneg %p415
    $region38: #{tpu_custom_call.1} parent=5 // pred_check_branch
      %418 = sbr.rel (%p416) target = $region40
    $region39: #{tpu_custom_call.1} parent=5 // pred_region
      %s419 = ssub.s32 %s9, 2
      // Predicated region
      $region41: #{tpu_custom_call.1} parent=39 // pred_check
        %p420 = pneg %p106
      $region42: #{tpu_custom_call.1} parent=39 // pred_check_branch
        %422 = sbr.rel (%p420) target = $region44
      $region43: #{tpu_custom_call.1} parent=39 // pred_region
        %p423 = scmp.lt.s32.totalorder %s15, 1
        %s424 = scalar_select %p423, %s15, 1
        %s425 = smul.addr %s424, 8
        %s426 = scalar_lea.vmem %s3, %s425
      $region44: #{tpu_custom_call.1} parent=39 // pred_fallthru
        _
    $region40: #{tpu_custom_call.1} parent=5 // pred_fallthru
      _
  $region6: #{tpu_custom_call.1} parent=0 // loop_footer
    %s13 = sadd.s32 1, %s9
  $region7: #{tpu_custom_call.1} parent=0 // loop_footer_branch
    %8 = sbr.rel target = $region3
  $region8: #{tpu_custom_call.1} parent=0 // loop_exit
    _

</llo_original>
